<compile_context>
chip_gen: v7x
topology: tpu7x:2x2x1
jax: 0.10.0
libtpu: 0.0.40
codegen_flags: <defaults>
</compile_context>

<pallas_src>
import functools

import jax
import jax.numpy as jnp
from jax.experimental import pallas as pl
from jax.experimental.pallas import tpu as pltpu

EPS = 1e-6  # torch.nn.functional.pairwise_distance default eps


def _round_up(x, m):
    return ((x + m - 1) // m) * m


def _tripletnet_kernel(q_ref, p_ref, n_ref, w_ref, b_ref,
                       d_ref, eq_ref, ep_ref, en_ref, *, d_real):
    dp_w = w_ref.shape[1]  # lane-padded embedding width

    w = w_ref[...]                 # (feat_p, Dp) bf16, VMEM-resident
    bias = b_ref[...]              # (1, Dp) f32

    # Three separate MXU matmuls (RHS stays resident; re-pushing weights is
    # hidden behind LHS feed).  f32 accumulation.
    emb_q = jnp.dot(q_ref[...], w, preferred_element_type=jnp.float32) + bias
    emb_p = jnp.dot(p_ref[...], w, preferred_element_type=jnp.float32) + bias
    emb_n = jnp.dot(n_ref[...], w, preferred_element_type=jnp.float32) + bias

    eq_ref[...] = emb_q.astype(eq_ref.dtype)
    ep_ref[...] = emb_p.astype(ep_ref.dtype)
    en_ref[...] = emb_n.astype(en_ref.dtype)

    # F.pairwise_distance(x1, x2, p=2): sqrt(sum((x1 - x2 + eps)^2)) per row.
    # eps only on the real (un-padded) embedding columns so zero-padding
    # D -> Dp does not perturb the distances.
    col = jax.lax.broadcasted_iota(jnp.int32, (1, dp_w), 1)
    eps_row = jnp.where(col < d_real, jnp.float32(EPS), jnp.float32(0.0))

    diff_p = emb_q - emb_p + eps_row
    diff_n = emb_q - emb_n + eps_row
    d_ref[:, 0:1] = jnp.sqrt(jnp.sum(diff_p * diff_p, axis=-1, keepdims=True))
    d_ref[:, 1:2] = jnp.sqrt(jnp.sum(diff_n * diff_n, axis=-1, keepdims=True))


def tripletnet_forward(Q, P, N, W, b, *, batch_tile=512):
    """Q, P, N: (B, C, H, W) float32.  W: (C*H*W, D).  b: (D,)."""
    B = Q.shape[0]
    feat, D = W.shape
    assert Q.shape[1] * Q.shape[2] * Q.shape[3] == feat

    feat_p = _round_up(feat, 128)   # lane/contract-axis pad for full-width MXU
    Dp = _round_up(D, 128)          # lane-pad embedding width

    # Batch tiling: sublane-pad B; guarantee >= 2 grid steps when possible so
    # v7x's two TensorCores both get work and the pipeline overlaps DMAs.
    B8 = _round_up(B, 8)
    TB = min(batch_tile, B8)
    if TB == B8 and B8 >= 16:
        TB = _round_up((B8 + 1) // 2, 8)
    B_pad = _round_up(B8, TB)
    nb = B_pad // TB

    in_dtype = jnp.bfloat16  # halves HBM read traffic; f32 accumulate in-kernel

    def prep(x):
        xf = x.reshape(B, feat).astype(jnp.float32)     # == x.view(B, -1)
        xf = jnp.pad(xf, ((0, B_pad - B), (0, feat_p - feat)))
        return xf.astype(in_dtype)

    q_flat, p_flat, n_flat = prep(Q), prep(P), prep(N)
    w_p = jnp.pad(W.astype(jnp.float32),
                  ((0, feat_p - feat), (0, Dp - D))).astype(in_dtype)
    b_p = jnp.pad(b.astype(jnp.float32).reshape(1, D), ((0, 0), (0, Dp - D)))

    x_spec = pl.BlockSpec((TB, feat_p), lambda i: (i, 0))
    w_spec = pl.BlockSpec((feat_p, Dp), lambda i: (0, 0))   # resident across grid
    b_spec = pl.BlockSpec((1, Dp), lambda i: (0, 0))        # resident across grid
    d_spec = pl.BlockSpec((TB, 2), lambda i: (i, 0))
    e_spec = pl.BlockSpec((TB, Dp), lambda i: (i, 0))

    out_shapes = (
        jax.ShapeDtypeStruct((B_pad, 2), jnp.float32),    # [dist_P, dist_N]
        jax.ShapeDtypeStruct((B_pad, Dp), jnp.float32),   # embedded_Q
        jax.ShapeDtypeStruct((B_pad, Dp), jnp.float32),   # embedded_P
        jax.ShapeDtypeStruct((B_pad, Dp), jnp.float32),   # embedded_N
    )

    # VMEM budget: double-buffered bf16 input tiles, double-buffered f32
    # output tiles, (double-buffered, never-refilled) weights, f32 matmul /
    # diff temporaries, plus headroom; floor 16 MiB, cap 32 MiB (v7x-safe).
    in_tiles = 2 * 3 * TB * feat_p * 2
    out_tiles = 2 * (3 * TB * Dp * 4 + TB * 2 * 4)
    weights = 2 * (feat_p * Dp * 2 + Dp * 4)
    temps = 8 * TB * Dp * 4
    footprint = in_tiles + out_tiles + weights + temps + (2 << 20)
    vmem_limit = int(min(max(footprint, 16 << 20), 32 << 20))

    cost = pl.CostEstimate(
        flops=2 * 3 * B_pad * feat_p * Dp + 10 * B_pad * Dp,
        transcendentals=2 * B_pad,
        bytes_accessed=(3 * B_pad * feat_p * 2 + feat_p * Dp * 2 + Dp * 4
                        + 3 * B_pad * Dp * 4 + B_pad * 2 * 4),
    )

    dist, emb_q, emb_p, emb_n = pl.pallas_call(
        functools.partial(_tripletnet_kernel, d_real=D),
        out_shape=out_shapes,
        grid_spec=pltpu.PrefetchScalarGridSpec(
            num_scalar_prefetch=0,
            grid=(nb,),
            in_specs=[x_spec, x_spec, x_spec, w_spec, b_spec],
            out_specs=(d_spec, e_spec, e_spec, e_spec),
        ),
        compiler_params=pltpu.CompilerParams(
            dimension_semantics=("parallel",),
            vmem_limit_bytes=vmem_limit,
        ),
        cost_estimate=cost,
    )(q_flat, p_flat, n_flat, w_p, b_p)

    # pairwise_distance returns shape (B,); slice off batch / width padding.
    return (dist[:B, 0], dist[:B, 1],
            emb_q[:B, :D], emb_p[:B, :D], emb_n[:B, :D])


if __name__ == "__main__":
    key = jax.random.PRNGKey(0)
    kq, kp, kn, kw, kb = jax.random.split(key, 5)

    B, C, H, W_sp = 2, 4, 16, 16
    D = 32
    feat = C * H * W_sp

    Q = jax.random.normal(kq, (B, C, H, W_sp), dtype=jnp.float32)
    P = jax.random.normal(kp, (B, C, H, W_sp), dtype=jnp.float32)
    N = jax.random.normal(kn, (B, C, H, W_sp), dtype=jnp.float32)

    # Deterministic embedding-net parameters (Linear: feat -> D)
    W_emb = jax.random.normal(kw, (feat, D), dtype=jnp.float32) * 0.02
    b_emb = jax.random.normal(kb, (D,), dtype=jnp.float32) * 0.02

    outs = tripletnet_forward(Q, P, N, W_emb, b_emb)
    outs = jax.block_until_ready(outs)
    dist_P, dist_N, eq, ep, en = outs

    assert dist_P.shape == (B,) and dist_N.shape == (B,)
    assert eq.shape == (B, D) and ep.shape == (B, D) and en.shape == (B, D)

    # Reference at matching precision: bf16-cast inputs/weights, f32 accumulate.
    def ref_emb(x):
        xb = x.reshape(B, feat).astype(jnp.bfloat16)
        wb = W_emb.astype(jnp.bfloat16)
        return (jnp.dot(xb, wb, preferred_element_type=jnp.float32,
                        precision=jax.lax.Precision.HIGHEST)
                + b_emb.astype(jnp.float32))

    req, rep, ren = ref_emb(Q), ref_emb(P), ref_emb(N)
    rdp = jnp.sqrt(jnp.sum((req - rep + EPS) ** 2, axis=-1))
    rdn = jnp.sqrt(jnp.sum((req - ren + EPS) ** 2, axis=-1))
    assert jnp.allclose(dist_P, rdp, atol=1e-2, rtol=1e-2)
    assert jnp.allclose(dist_N, rdn, atol=1e-2, rtol=1e-2)
    assert jnp.allclose(eq, req, atol=1e-2, rtol=1e-2)
    assert jnp.allclose(ep, rep, atol=1e-2, rtol=1e-2)
    assert jnp.allclose(en, ren, atol=1e-2, rtol=1e-2)

    # Looser sanity check against the full-f32 PyTorch-equivalent reference
    # (bf16 input cast drifts embeddings by ~1e-2 relative, acceptable for
    # the triplet margin loss).
    def ref_emb_f32(x):
        return jnp.dot(x.reshape(B, feat), W_emb,
                       precision=jax.lax.Precision.HIGHEST) + b_emb
    fq = ref_emb_f32(Q)
    assert jnp.allclose(eq, fq, atol=5e-2, rtol=5e-2)

    print("KERNEL_OK")
</pallas_src>

<mosaic_0001>
module attributes {stable_mosaic.version = 11 : i64} {
  func.func @_tripletnet_kernel(%arg0: i32, %arg1: memref<8x1024xbf16, #tpu.memory_space<vmem>>, %arg2: memref<8x1024xbf16, #tpu.memory_space<vmem>>, %arg3: memref<8x1024xbf16, #tpu.memory_space<vmem>>, %arg4: memref<1024x128xbf16, #tpu.memory_space<vmem>>, %arg5: memref<1x128xf32, #tpu.memory_space<vmem>>, %arg6: memref<8x2xf32, #tpu.memory_space<vmem>>, %arg7: memref<8x128xf32, #tpu.memory_space<vmem>>, %arg8: memref<8x128xf32, #tpu.memory_space<vmem>>, %arg9: memref<8x128xf32, #tpu.memory_space<vmem>>) attributes {dimension_semantics = [#tpu.dimension_semantics<parallel>], iteration_bounds = array<i64: 1>, scalar_prefetch = 0 : i64, scratch_operands = 0 : i64, tpu.core_type = #tpu.core_type<tc>, window_params = [{transform_indices = @transform_0, window_bounds = array<i64: 8, 1024>}, {transform_indices = @transform_1, window_bounds = array<i64: 8, 1024>}, {transform_indices = @transform_2, window_bounds = array<i64: 8, 1024>}, {pipeline_mode = #tpu.pipeline_mode<synchronous>, transform_indices = @transform_3, window_bounds = array<i64: 1024, 128>}, {pipeline_mode = #tpu.pipeline_mode<synchronous>, transform_indices = @transform_4, window_bounds = array<i64: 1, 128>}, {transform_indices = @transform_5, window_bounds = array<i64: 8, 2>}, {transform_indices = @transform_6, window_bounds = array<i64: 8, 128>}, {transform_indices = @transform_7, window_bounds = array<i64: 8, 128>}, {transform_indices = @transform_8, window_bounds = array<i64: 8, 128>}]} {
    %c0 = arith.constant 0 : index
    %c0_0 = arith.constant 0 : index
    %0 = vector.load %arg4[%c0, %c0_0] : memref<1024x128xbf16, #tpu.memory_space<vmem>>, vector<1024x128xbf16>
    %c0_1 = arith.constant 0 : index
    %c0_2 = arith.constant 0 : index
    %1 = vector.load %arg5[%c0_1, %c0_2] : memref<1x128xf32, #tpu.memory_space<vmem>>, vector<1x128xf32>
    %c0_3 = arith.constant 0 : index
    %c0_4 = arith.constant 0 : index
    %2 = vector.load %arg1[%c0_3, %c0_4] : memref<8x1024xbf16, #tpu.memory_space<vmem>>, vector<8x1024xbf16>
    %cst = arith.constant dense<0.000000e+00> : vector<8x128xf32>
    %3 = tpu.matmul %2, %0, %cst {dimension_numbers = #tpu.dot_dimension_numbers<[1], [0], [0], [1], [0, 0, 1, 1], [], []>} : vector<8x1024xbf16>, vector<1024x128xbf16>, vector<8x128xf32> -> vector<8x128xf32>
    %4 = vector.broadcast %1 : vector<1x128xf32> to vector<8x128xf32>
    %5 = arith.addf %3, %4 : vector<8x128xf32>
    %c0_5 = arith.constant 0 : index
    %c0_6 = arith.constant 0 : index
    %6 = vector.load %arg2[%c0_5, %c0_6] : memref<8x1024xbf16, #tpu.memory_space<vmem>>, vector<8x1024xbf16>
    %cst_7 = arith.constant dense<0.000000e+00> : vector<8x128xf32>
    %7 = tpu.matmul %6, %0, %cst_7 {dimension_numbers = #tpu.dot_dimension_numbers<[1], [0], [0], [1], [0, 0, 1, 1], [], []>} : vector<8x1024xbf16>, vector<1024x128xbf16>, vector<8x128xf32> -> vector<8x128xf32>
    %8 = vector.broadcast %1 : vector<1x128xf32> to vector<8x128xf32>
    %9 = arith.addf %7, %8 : vector<8x128xf32>
    %c0_8 = arith.constant 0 : index
    %c0_9 = arith.constant 0 : index
    %10 = vector.load %arg3[%c0_8, %c0_9] : memref<8x1024xbf16, #tpu.memory_space<vmem>>, vector<8x1024xbf16>
    %cst_10 = arith.constant dense<0.000000e+00> : vector<8x128xf32>
    %11 = tpu.matmul %10, %0, %cst_10 {dimension_numbers = #tpu.dot_dimension_numbers<[1], [0], [0], [1], [0, 0, 1, 1], [], []>} : vector<8x1024xbf16>, vector<1024x128xbf16>, vector<8x128xf32> -> vector<8x128xf32>
    %12 = vector.broadcast %1 : vector<1x128xf32> to vector<8x128xf32>
    %13 = arith.addf %11, %12 : vector<8x128xf32>
    %c0_11 = arith.constant 0 : index
    %c0_12 = arith.constant 0 : index
    %14 = vector.load %arg7[%c0_11, %c0_12] : memref<8x128xf32, #tpu.memory_space<vmem>>, vector<8x128xf32>
    tpu.vector_store %arg7[%c0_11, %c0_12], %5 {strides = array<i32>} : memref<8x128xf32, #tpu.memory_space<vmem>>, vector<8x128xf32>,
    %c0_13 = arith.constant 0 : index
    %c0_14 = arith.constant 0 : index
    %15 = vector.load %arg8[%c0_13, %c0_14] : memref<8x128xf32, #tpu.memory_space<vmem>>, vector<8x128xf32>
    tpu.vector_store %arg8[%c0_13, %c0_14], %9 {strides = array<i32>} : memref<8x128xf32, #tpu.memory_space<vmem>>, vector<8x128xf32>,
    %c0_15 = arith.constant 0 : index
    %c0_16 = arith.constant 0 : index
    %16 = vector.load %arg9[%c0_15, %c0_16] : memref<8x128xf32, #tpu.memory_space<vmem>>, vector<8x128xf32>
    tpu.vector_store %arg9[%c0_15, %c0_16], %13 {strides = array<i32>} : memref<8x128xf32, #tpu.memory_space<vmem>>, vector<8x128xf32>,
    %17 = tpu.iota {dimensions = array<i32: 1>} : vector<1x128xi32>
    %c32_i32 = arith.constant 32 : i32
    %18 = vector.broadcast %c32_i32 : i32 to vector<1x128xi32>
    %19 = arith.cmpi slt, %17, %18 : vector<1x128xi32>
    %cst_17 = arith.constant 9.99999997E-7 : f32
    %cst_18 = arith.constant 0.000000e+00 : f32
    %20 = vector.broadcast %cst_17 : f32 to vector<1x128xf32>
    %21 = vector.broadcast %cst_18 : f32 to vector<1x128xf32>
    %22 = arith.select %19, %20, %21 : vector<1x128xi1>, vector<1x128xf32>
    %23 = arith.subf %5, %9 : vector<8x128xf32>
    %24 = vector.broadcast %22 : vector<1x128xf32> to vector<8x128xf32>
    %25 = arith.addf %23, %24 : vector<8x128xf32>
    %26 = arith.subf %5, %13 : vector<8x128xf32>
    %27 = vector.broadcast %22 : vector<1x128xf32> to vector<8x128xf32>
    %28 = arith.addf %26, %27 : vector<8x128xf32>
    %29 = arith.mulf %25, %25 : vector<8x128xf32>
    %cst_19 = arith.constant dense<0.000000e+00> : vector<8xf32>
    %30 = vector.multi_reduction <add>, %29, %cst_19 [1] : vector<8x128xf32> to vector<8xf32>
    %31 = vector.shape_cast %30 : vector<8xf32> to vector<8x1xf32>
    %32 = math.sqrt %31 : vector<8x1xf32>
    %c0_20 = arith.constant 0 : index
    %c0_21 = arith.constant 0 : index
    %33 = vector.load %arg6[%c0_20, %c0_21] : memref<8x2xf32, #tpu.memory_space<vmem>>, vector<8x1xf32>
    tpu.vector_store %arg6[%c0_20, %c0_21], %32 {strides = array<i32>} : memref<8x2xf32, #tpu.memory_space<vmem>>, vector<8x1xf32>,
    %34 = arith.mulf %28, %28 : vector<8x128xf32>
    %cst_22 = arith.constant dense<0.000000e+00> : vector<8xf32>
    %35 = vector.multi_reduction <add>, %34, %cst_22 [1] : vector<8x128xf32> to vector<8xf32>
    %36 = vector.shape_cast %35 : vector<8xf32> to vector<8x1xf32>
    %37 = math.sqrt %36 : vector<8x1xf32>
    %c0_23 = arith.constant 0 : index
    %c1 = arith.constant 1 : index
    %38 = vector.load %arg6[%c0_23, %c1] : memref<8x2xf32, #tpu.memory_space<vmem>>, vector<8x1xf32>
    tpu.vector_store %arg6[%c0_23, %c1], %37 {strides = array<i32>} : memref<8x2xf32, #tpu.memory_space<vmem>>, vector<8x1xf32>,
    return
  }
  func.func @transform_0(%arg0: i32) -> (i32, i32) {
    %c0_i32 = arith.constant 0 : i32
    %c0_i32_0 = arith.constant 0 : i32
    return %arg0, %c0_i32 : i32, i32
  }
  func.func @transform_1(%arg0: i32) -> (i32, i32) {
    %c0_i32 = arith.constant 0 : i32
    %c0_i32_0 = arith.constant 0 : i32
    return %arg0, %c0_i32 : i32, i32
  }
  func.func @transform_2(%arg0: i32) -> (i32, i32) {
    %c0_i32 = arith.constant 0 : i32
    %c0_i32_0 = arith.constant 0 : i32
    return %arg0, %c0_i32 : i32, i32
  }
  func.func @transform_3(%arg0: i32) -> (i32, i32) {
    %c0_i32 = arith.constant 0 : i32
    %c0_i32_0 = arith.constant 0 : i32
    %c0_i32_1 = arith.constant 0 : i32
    return %c0_i32, %c0_i32_0 : i32, i32
  }
  func.func @transform_4(%arg0: i32) -> (i32, i32) {
    %c0_i32 = arith.constant 0 : i32
    %c0_i32_0 = arith.constant 0 : i32
    %c0_i32_1 = arith.constant 0 : i32
    return %c0_i32, %c0_i32_0 : i32, i32
  }
  func.func @transform_5(%arg0: i32) -> (i32, i32) {
    %c0_i32 = arith.constant 0 : i32
    %c0_i32_0 = arith.constant 0 : i32
    return %arg0, %c0_i32 : i32, i32
  }
  func.func @transform_6(%arg0: i32) -> (i32, i32) {
    %c0_i32 = arith.constant 0 : i32
    %c0_i32_0 = arith.constant 0 : i32
    return %arg0, %c0_i32 : i32, i32
  }
  func.func @transform_7(%arg0: i32) -> (i32, i32) {
    %c0_i32 = arith.constant 0 : i32
    %c0_i32_0 = arith.constant 0 : i32
    return %arg0, %c0_i32 : i32, i32
  }
  func.func @transform_8(%arg0: i32) -> (i32, i32) {
    %c0_i32 = arith.constant 0 : i32
    %c0_i32_0 = arith.constant 0 : i32
    return %arg0, %c0_i32 : i32, i32
  }
}

</mosaic_0001>

<llo_original>
// kernel: tpu_custom_call.1
$region0: #{tpu_custom_call.1}
  #allocation0 [shape = 'u32[]', space=smem, size = 0x4, offset = 0x4, fixed_abs, tag = 'smem constant byte address 0x4 - core index']
  #allocation1 [shape = 'u32[144,128]{1,0:T(1,128)}', space=vmem, size = 0x12000, scoped, tag = 'internal scratch']
  %s0 = inlined_call_operand.hbm [shape: bf16[8,1024], index: 0, kind: input, shape index: {}]
  %s1 = inlined_call_operand.hbm [shape: bf16[8,1024], index: 1, kind: input, shape index: {}]
  %s2 = inlined_call_operand.hbm [shape: bf16[8,1024], index: 2, kind: input, shape index: {}]
  %s3 = inlined_call_operand.hbm [shape: bf16[1024,128], index: 3, kind: input, shape index: {}]
  %s4 = inlined_call_operand.vmem [shape: f32[1,128], index: 4, kind: input, shape index: {}]
  %s5 = inlined_call_operand.vmem [shape: f32[8,2], index: 5, kind: output, shape index: {0}]
  %s6 = inlined_call_operand.hbm [shape: f32[8,128], index: 6, kind: output, shape index: {1}]
  %s7 = inlined_call_operand.hbm [shape: f32[8,128], index: 7, kind: output, shape index: {2}]
  %s8 = inlined_call_operand.hbm [shape: f32[8,128], index: 8, kind: output, shape index: {3}]
  %9 = xla_tuple %s5, %s6, %s7, %s8
  %s10 = sld [smem:[#allocation0]]
  $region70: #{tpu_custom_call.1} parent=0
    _
  %s12 = ssub.s32 1, %s10
  %s13 = scalar_select 0, %s12, %s10
  $region1: #{tpu_custom_call.1} parent=0
    #allocation2 [shape = 'u8[16384]{0}', space=vmem, size = 0x4000, scoped, tag = 'input window, operand 0, single buffered']
    #allocation3 [shape = 's32[1]{0}', space=sflag, size = 0x4, scoped, tag = 'scoped memory for tpu_custom_call.1']
    #allocation4 [shape = 's32[1]{0}', space=sflag, size = 0x4, scoped, tag = 'scoped memory for tpu_custom_call.1']
    #allocation5 [shape = 'u8[16384]{0}', space=vmem, size = 0x4000, scoped, tag = 'input window, operand 1, single buffered']
    #allocation6 [shape = 's32[1]{0}', space=sflag, size = 0x4, scoped, tag = 'scoped memory for tpu_custom_call.1']
    #allocation7 [shape = 'u8[16384]{0}', space=vmem, size = 0x4000, scoped, tag = 'input window, operand 2, single buffered']
    #allocation8 [shape = 'u8[262144]{0}', space=vmem, size = 0x40000, scoped, tag = 'input window, operand 3, single buffered']
    #allocation9 [shape = 's32[1]{0}', space=sflag, size = 0x4, scoped, tag = 'scoped memory for tpu_custom_call.1']
    #allocation10 [shape = 'u8[4096]{0}', space=vmem, size = 0x1000, scoped, tag = 'output window, operand 1, single buffered']
    #allocation11 [shape = 'u8[4096]{0}', space=vmem, size = 0x1000, scoped, tag = 'output window, operand 2, single buffered']
    #allocation12 [shape = 's32[1]{0}', space=sflag, size = 0x4, scoped, tag = 'scoped memory for tpu_custom_call.1']
    #allocation13 [shape = 'u8[4096]{0}', space=vmem, size = 0x1000, scoped, tag = 'output window, operand 3, single buffered']
    %14 = vsyncpa [#allocation3], 0
    %15 = vsyncpa [#allocation6], 0
    %16 = vsyncpa [#allocation9], 0
    %17 = vsyncpa [#allocation4], 0
    %18 = vsyncpa [#allocation12], 0
    // Predicated region
    $region2: #{tpu_custom_call.1} parent=1 // pred_check
      _
    $region3: #{tpu_custom_call.1} parent=1 // pred_check_branch
      %20 = sbr.rel (0) target = $region5
    $region4: #{tpu_custom_call.1} parent=1 // pred_region
      %s22 = ssub.s32 512, 512
      %23 = vsyncadd [#allocation3], %s22
      %s25 = sshll.u32 [#allocation2], 4
      %s26 = int_to_ptr.vmem [resolvable:$true] %s25
      %28 = dma.hbm_to_vmem [thread:$0]  %s0, 512, %s26, [#allocation3]
    $region5: #{tpu_custom_call.1} parent=1 // pred_fallthru
      _
    // Predicated region
    $region6: #{tpu_custom_call.1} parent=1 // pred_check
      _
    $region7: #{tpu_custom_call.1} parent=1 // pred_check_branch
      %30 = sbr.rel (0) target = $region9
    $region8: #{tpu_custom_call.1} parent=1 // pred_region
      %s32 = ssub.s32 512, 512
      %33 = vsyncadd [#allocation6], %s32
      %s35 = sshll.u32 [#allocation5], 4
      %s36 = int_to_ptr.vmem [resolvable:$true] %s35
      %38 = dma.hbm_to_vmem [thread:$0]  %s1, 512, %s36, [#allocation6]
    $region9: #{tpu_custom_call.1} parent=1 // pred_fallthru
      _
    // Predicated region
    $region10: #{tpu_custom_call.1} parent=1 // pred_check
      _
    $region11: #{tpu_custom_call.1} parent=1 // pred_check_branch
      %40 = sbr.rel (0) target = $region13
    $region12: #{tpu_custom_call.1} parent=1 // pred_region
      %s42 = ssub.s32 512, 512
      %43 = vsyncadd [#allocation6], %s42
      %s45 = sshll.u32 [#allocation7], 4
      %s46 = int_to_ptr.vmem [resolvable:$true] %s45
      %48 = dma.hbm_to_vmem [thread:$0]  %s2, 512, %s46, [#allocation6]
    $region13: #{tpu_custom_call.1} parent=1 // pred_fallthru
      _
    // Predicated region
    $region14: #{tpu_custom_call.1} parent=1 // pred_check
      _
    $region15: #{tpu_custom_call.1} parent=1 // pred_check_branch
      %50 = sbr.rel (0) target = $region17
    $region16: #{tpu_custom_call.1} parent=1 // pred_region
      %s52 = ssub.s32 8192, 8192
      %53 = vsyncadd [#allocation9], %s52
      %s54 = sshll.u32 [#allocation8], 4
      %s55 = int_to_ptr.vmem [resolvable:$true] %s54
      %60 = dma.hbm_to_vmem [thread:$0]  %s3, 8192, %s55, [#allocation9], 64, 64, 4
    $region17: #{tpu_custom_call.1} parent=1 // pred_fallthru
      _
    // Predicated region
    $region18: #{tpu_custom_call.1} parent=1 // pred_check
      _
    $region19: #{tpu_custom_call.1} parent=1 // pred_check_branch
      %62 = sbr.rel (0) target = $region21
    $region20: #{tpu_custom_call.1} parent=1 // pred_region
      _
    $region21: #{tpu_custom_call.1} parent=1 // pred_fallthru
      _
    // Predicated region
    $region22: #{tpu_custom_call.1} parent=1 // pred_check
      _
    $region23: #{tpu_custom_call.1} parent=1 // pred_check_branch
      %64 = sbr.rel (0) target = $region25
    $region24: #{tpu_custom_call.1} parent=1 // pred_region
      %65 = dma.done [#allocation3], 512
    $region25: #{tpu_custom_call.1} parent=1 // pred_fallthru
      _
    // Predicated region
    $region26: #{tpu_custom_call.1} parent=1 // pred_check
      _
    $region27: #{tpu_custom_call.1} parent=1 // pred_check_branch
      %67 = sbr.rel (0) target = $region29
    $region28: #{tpu_custom_call.1} parent=1 // pred_region
      %68 = dma.done [#allocation6], 512
    $region29: #{tpu_custom_call.1} parent=1 // pred_fallthru
      _
    // Predicated region
    $region30: #{tpu_custom_call.1} parent=1 // pred_check
      _
    $region31: #{tpu_custom_call.1} parent=1 // pred_check_branch
      %70 = sbr.rel (0) target = $region33
    $region32: #{tpu_custom_call.1} parent=1 // pred_region
      %71 = dma.done [#allocation6], 512
    $region33: #{tpu_custom_call.1} parent=1 // pred_fallthru
      _
    // Predicated region
    $region34: #{tpu_custom_call.1} parent=1 // pred_check
      _
    $region35: #{tpu_custom_call.1} parent=1 // pred_check_branch
      %73 = sbr.rel (0) target = $region37
    $region36: #{tpu_custom_call.1} parent=1 // pred_region
      %74 = dma.done [#allocation9], 8192
    $region37: #{tpu_custom_call.1} parent=1 // pred_fallthru
      _
    %v76 = vld [vmem:[#allocation8] sm:$0xf]
    %v77 = vld [vmem:[#allocation8 + $0x4] sm:$0xf]
    %v78 = vld [vmem:[#allocation8 + $0x8] sm:$0xf]
    %v79 = vld [vmem:[#allocation8 + $0xc] sm:$0xf]
    %v80 = vld [vmem:[#allocation8 + $0x10] sm:$0xf]
    %v81 = vld [vmem:[#allocation8 + $0x14] sm:$0xf]
    %v82 = vld [vmem:[#allocation8 + $0x18] sm:$0xf]
    %v83 = vld [vmem:[#allocation8 + $0x1c] sm:$0xf]
    %v84 = vld [vmem:[#allocation8 + $0x20] sm:$0xf]
    %v85 = vld [vmem:[#allocation8 + $0x24] sm:$0xf]
    %v86 = vld [vmem:[#allocation8 + $0x28] sm:$0xf]
    %v87 = vld [vmem:[#allocation8 + $0x2c] sm:$0xf]
    %v88 = vld [vmem:[#allocation8 + $0x30] sm:$0xf]
    %v89 = vld [vmem:[#allocation8 + $0x34] sm:$0xf]
    %v90 = vld [vmem:[#allocation8 + $0x38] sm:$0xf]
    %v91 = vld [vmem:[#allocation8 + $0x3c] sm:$0xf]
    %v92 = vld [vmem:[#allocation8 + $0x40] sm:$0xf]
    %v93 = vld [vmem:[#allocation8 + $0x44] sm:$0xf]
    %v94 = vld [vmem:[#allocation8 + $0x48] sm:$0xf]
    %v95 = vld [vmem:[#allocation8 + $0x4c] sm:$0xf]
    %v96 = vld [vmem:[#allocation8 + $0x50] sm:$0xf]
    %v97 = vld [vmem:[#allocation8 + $0x54] sm:$0xf]
    %v98 = vld [vmem:[#allocation8 + $0x58] sm:$0xf]
    %v99 = vld [vmem:[#allocation8 + $0x5c] sm:$0xf]
    %v100 = vld [vmem:[#allocation8 + $0x60] sm:$0xf]
    %v101 = vld [vmem:[#allocation8 + $0x64] sm:$0xf]
    %v102 = vld [vmem:[#allocation8 + $0x68] sm:$0xf]
    %v103 = vld [vmem:[#allocation8 + $0x6c] sm:$0xf]
    %v104 = vld [vmem:[#allocation8 + $0x70] sm:$0xf]
    %v105 = vld [vmem:[#allocation8 + $0x74] sm:$0xf]
    %v106 = vld [vmem:[#allocation8 + $0x78] sm:$0xf]
    %v107 = vld [vmem:[#allocation8 + $0x7c] sm:$0xf]
    %v108 = vld [vmem:[#allocation8 + $0x80] sm:$0xf]
    %v109 = vld [vmem:[#allocation8 + $0x84] sm:$0xf]
    %v110 = vld [vmem:[#allocation8 + $0x88] sm:$0xf]
    %v111 = vld [vmem:[#allocation8 + $0x8c] sm:$0xf]
    %v112 = vld [vmem:[#allocation8 + $0x90] sm:$0xf]
    %v113 = vld [vmem:[#allocation8 + $0x94] sm:$0xf]
    %v114 = vld [vmem:[#allocation8 + $0x98] sm:$0xf]
    %v115 = vld [vmem:[#allocation8 + $0x9c] sm:$0xf]
    %v116 = vld [vmem:[#allocation8 + $0xa0] sm:$0xf]
    %v117 = vld [vmem:[#allocation8 + $0xa4] sm:$0xf]
    %v118 = vld [vmem:[#allocation8 + $0xa8] sm:$0xf]
    %v119 = vld [vmem:[#allocation8 + $0xac] sm:$0xf]
    %v120 = vld [vmem:[#allocation8 + $0xb0] sm:$0xf]
    %v121 = vld [vmem:[#allocation8 + $0xb4] sm:$0xf]
    %v122 = vld [vmem:[#allocation8 + $0xb8] sm:$0xf]
    %v123 = vld [vmem:[#allocation8 + $0xbc] sm:$0xf]
    %v124 = vld [vmem:[#allocation8 + $0xc0] sm:$0xf]
    %v125 = vld [vmem:[#allocation8 + $0xc4] sm:$0xf]
    %v126 = vld [vmem:[#allocation8 + $0xc8] sm:$0xf]
    %v127 = vld [vmem:[#allocation8 + $0xcc] sm:$0xf]
    %v128 = vld [vmem:[#allocation8 + $0xd0] sm:$0xf]
    %v129 = vld [vmem:[#allocation8 + $0xd4] sm:$0xf]
    %v130 = vld [vmem:[#allocation8 + $0xd8] sm:$0xf]
    %v131 = vld [vmem:[#allocation8 + $0xdc] sm:$0xf]
    %v132 = vld [vmem:[#allocation8 + $0xe0] sm:$0xf]
    %v133 = vld [vmem:[#allocation8 + $0xe4] sm:$0xf]
    %v134 = vld [vmem:[#allocation8 + $0xe8] sm:$0xf]
    %v135 = vld [vmem:[#allocation8 + $0xec] sm:$0xf]
    %v136 = vld [vmem:[#allocation8 + $0xf0] sm:$0xf]
    %v137 = vld [vmem:[#allocation8 + $0xf4] sm:$0xf]
    %v138 = vld [vmem:[#allocation8 + $0xf8] sm:$0xf]
    %v139 = vld [vmem:[#allocation8 + $0xfc] sm:$0xf]
    %v140 = vld [vmem:[#allocation8 + $0x100] sm:$0xf]
    %v141 = vld [vmem:[#allocation8 + $0x104] sm:$0xf]
    %v142 = vld [vmem:[#allocation8 + $0x108] sm:$0xf]
    %v143 = vld [vmem:[#allocation8 + $0x10c] sm:$0xf]
    %v144 = vld [vmem:[#allocation8 + $0x110] sm:$0xf]
    %v145 = vld [vmem:[#allocation8 + $0x114] sm:$0xf]
    %v146 = vld [vmem:[#allocation8 + $0x118] sm:$0xf]
    %v147 = vld [vmem:[#allocation8 + $0x11c] sm:$0xf]
    %v148 = vld [vmem:[#allocation8 + $0x120] sm:$0xf]
    %v149 = vld [vmem:[#allocation8 + $0x124] sm:$0xf]
    %v150 = vld [vmem:[#allocation8 + $0x128] sm:$0xf]
    %v151 = vld [vmem:[#allocation8 + $0x12c] sm:$0xf]
    %v152 = vld [vmem:[#allocation8 + $0x130] sm:$0xf]
    %v153 = vld [vmem:[#allocation8 + $0x134] sm:$0xf]
    %v154 = vld [vmem:[#allocation8 + $0x138] sm:$0xf]
    %v155 = vld [vmem:[#allocation8 + $0x13c] sm:$0xf]
    %v156 = vld [vmem:[#allocation8 + $0x140] sm:$0xf]
    %v157 = vld [vmem:[#allocation8 + $0x144] sm:$0xf]
    %v158 = vld [vmem:[#allocation8 + $0x148] sm:$0xf]
    %v159 = vld [vmem:[#allocation8 + $0x14c] sm:$0xf]
    %v160 = vld [vmem:[#allocation8 + $0x150] sm:$0xf]
    %v161 = vld [vmem:[#allocation8 + $0x154] sm:$0xf]
    %v162 = vld [vmem:[#allocation8 + $0x158] sm:$0xf]
    %v163 = vld [vmem:[#allocation8 + $0x15c] sm:$0xf]
    %v164 = vld [vmem:[#allocation8 + $0x160] sm:$0xf]
    %v165 = vld [vmem:[#allocation8 + $0x164] sm:$0xf]
    %v166 = vld [vmem:[#allocation8 + $0x168] sm:$0xf]
    %v167 = vld [vmem:[#allocation8 + $0x16c] sm:$0xf]
    %v168 = vld [vmem:[#allocation8 + $0x170] sm:$0xf]
    %v169 = vld [vmem:[#allocation8 + $0x174] sm:$0xf]
    %v170 = vld [vmem:[#allocation8 + $0x178] sm:$0xf]
    %v171 = vld [vmem:[#allocation8 + $0x17c] sm:$0xf]
    %v172 = vld [vmem:[#allocation8 + $0x180] sm:$0xf]
    %v173 = vld [vmem:[#allocation8 + $0x184] sm:$0xf]
    %v174 = vld [vmem:[#allocation8 + $0x188] sm:$0xf]
    %v175 = vld [vmem:[#allocation8 + $0x18c] sm:$0xf]
    %v176 = vld [vmem:[#allocation8 + $0x190] sm:$0xf]
    %v177 = vld [vmem:[#allocation8 + $0x194] sm:$0xf]
    %v178 = vld [vmem:[#allocation8 + $0x198] sm:$0xf]
    %v179 = vld [vmem:[#allocation8 + $0x19c] sm:$0xf]
    %v180 = vld [vmem:[#allocation8 + $0x1a0] sm:$0xf]
    %v181 = vld [vmem:[#allocation8 + $0x1a4] sm:$0xf]
    %v182 = vld [vmem:[#allocation8 + $0x1a8] sm:$0xf]
    %v183 = vld [vmem:[#allocation8 + $0x1ac] sm:$0xf]
    %v184 = vld [vmem:[#allocation8 + $0x1b0] sm:$0xf]
    %v185 = vld [vmem:[#allocation8 + $0x1b4] sm:$0xf]
    %v186 = vld [vmem:[#allocation8 + $0x1b8] sm:$0xf]
    %v187 = vld [vmem:[#allocation8 + $0x1bc] sm:$0xf]
    %v188 = vld [vmem:[#allocation8 + $0x1c0] sm:$0xf]
    %v189 = vld [vmem:[#allocation8 + $0x1c4] sm:$0xf]
    %v190 = vld [vmem:[#allocation8 + $0x1c8] sm:$0xf]
    %v191 = vld [vmem:[#allocation8 + $0x1cc] sm:$0xf]
    %v192 = vld [vmem:[#allocation8 + $0x1d0] sm:$0xf]
    %v193 = vld [vmem:[#allocation8 + $0x1d4] sm:$0xf]
    %v194 = vld [vmem:[#allocation8 + $0x1d8] sm:$0xf]
    %v195 = vld [vmem:[#allocation8 + $0x1dc] sm:$0xf]
    %v196 = vld [vmem:[#allocation8 + $0x1e0] sm:$0xf]
    %v197 = vld [vmem:[#allocation8 + $0x1e4] sm:$0xf]
    %v198 = vld [vmem:[#allocation8 + $0x1e8] sm:$0xf]
    %v199 = vld [vmem:[#allocation8 + $0x1ec] sm:$0xf]
    %v200 = vld [vmem:[#allocation8 + $0x1f0] sm:$0xf]
    %v201 = vld [vmem:[#allocation8 + $0x1f4] sm:$0xf]
    %v202 = vld [vmem:[#allocation8 + $0x1f8] sm:$0xf]
    %v203 = vld [vmem:[#allocation8 + $0x1fc] sm:$0xf]
    %v204 = vld [vmem:[%s4] sm:$0x1]
    %v205 = vld [vmem:[#allocation2] sm:$0xff]
    %v206 = vld [vmem:[#allocation2 + $0x8] sm:$0xff]
    %v207 = vld [vmem:[#allocation2 + $0x10] sm:$0xff]
    %v208 = vld [vmem:[#allocation2 + $0x18] sm:$0xff]
    %v210 = vlaneseq
    %v211 = vshrl.u32 %v210, 7
    %v212 = vsub.s32 0, %v211
    %v213 = vrot.slane %v204, %v212
    %v219 = vunpack.c.l.b16 %v205
    %v220 = vunpack.c.h.b16 %v205
    %v221 = vunpack.c.l.b16 %v206
    %v222 = vunpack.c.h.b16 %v206
    %v223 = vunpack.c.l.b16 %v207
    %v224 = vunpack.c.h.b16 %v207
    %v225 = vunpack.c.l.b16 %v208
    %v226 = vunpack.c.h.b16 %v208
    %v227 = vpack.c.b16 %v219, %v219
    %v228 = vpack.c.b16 %v220, %v220
    %v229 = vpack.c.b16 %v221, %v221
    %v230 = vpack.c.b16 %v222, %v222
    %v231 = vpack.c.b16 %v223, %v223
    %v232 = vpack.c.b16 %v224, %v224
    %v233 = vpack.c.b16 %v225, %v225
    %v234 = vpack.c.b16 %v226, %v226
    %v371 = vunpack.c.l.b16 %v76
    %v372 = vunpack.c.l.b16 %v77
    %v373 = vunpack.c.l.b16 %v78
    %v374 = vunpack.c.l.b16 %v79
    %v375 = vunpack.c.l.b16 %v80
    %v376 = vunpack.c.l.b16 %v81
    %v377 = vunpack.c.l.b16 %v82
    %v378 = vunpack.c.l.b16 %v83
    %v379 = vunpack.c.l.b16 %v84
    %v380 = vunpack.c.l.b16 %v85
    %v381 = vunpack.c.l.b16 %v86
    %v382 = vunpack.c.l.b16 %v87
    %v383 = vunpack.c.l.b16 %v88
    %v384 = vunpack.c.l.b16 %v89
    %v385 = vunpack.c.l.b16 %v90
    %v386 = vunpack.c.l.b16 %v91
    %v387 = vunpack.c.l.b16 %v92
    %v388 = vunpack.c.l.b16 %v93
    %v389 = vunpack.c.l.b16 %v94
    %v390 = vunpack.c.l.b16 %v95
    %v391 = vunpack.c.l.b16 %v96
    %v392 = vunpack.c.l.b16 %v97
    %v393 = vunpack.c.l.b16 %v98
    %v394 = vunpack.c.l.b16 %v99
    %v395 = vunpack.c.l.b16 %v100
    %v396 = vunpack.c.l.b16 %v101
    %v397 = vunpack.c.l.b16 %v102
    %v398 = vunpack.c.l.b16 %v103
    %v399 = vunpack.c.l.b16 %v104
    %v400 = vunpack.c.l.b16 %v105
    %v401 = vunpack.c.l.b16 %v106
    %v402 = vunpack.c.l.b16 %v107
    %v403 = vunpack.c.l.b16 %v108
    %v404 = vunpack.c.l.b16 %v109
    %v405 = vunpack.c.l.b16 %v110
    %v406 = vunpack.c.l.b16 %v111
    %v407 = vunpack.c.l.b16 %v112
    %v408 = vunpack.c.l.b16 %v113
    %v409 = vunpack.c.l.b16 %v114
    %v410 = vunpack.c.l.b16 %v115
    %v411 = vunpack.c.l.b16 %v116
    %v412 = vunpack.c.l.b16 %v117
    %v413 = vunpack.c.l.b16 %v118
    %v414 = vunpack.c.l.b16 %v119
    %v415 = vunpack.c.l.b16 %v120
    %v416 = vunpack.c.l.b16 %v121
    %v417 = vunpack.c.l.b16 %v122
    %v418 = vunpack.c.l.b16 %v123
    %v419 = vunpack.c.l.b16 %v124
    %v420 = vunpack.c.l.b16 %v125
    %v421 = vunpack.c.l.b16 %v126
    %v422 = vunpack.c.l.b16 %v127
    %v423 = vunpack.c.l.b16 %v128
    %v424 = vunpack.c.l.b16 %v129
    %v425 = vunpack.c.l.b16 %v130
    %v426 = vunpack.c.l.b16 %v131
    %v427 = vunpack.c.l.b16 %v132
    %v428 = vunpack.c.l.b16 %v133
    %v429 = vunpack.c.l.b16 %v134
    %v430 = vunpack.c.l.b16 %v135
    %v431 = vunpack.c.l.b16 %v136
    %v432 = vunpack.c.l.b16 %v137
    %v433 = vunpack.c.l.b16 %v138
    %v434 = vunpack.c.l.b16 %v139
    %v435 = vunpack.c.l.b16 %v140
    %v436 = vunpack.c.l.b16 %v141
    %v437 = vunpack.c.l.b16 %v142
    %v438 = vunpack.c.l.b16 %v143
    %v439 = vunpack.c.l.b16 %v144
    %v440 = vunpack.c.l.b16 %v145
    %v441 = vunpack.c.l.b16 %v146
    %v442 = vunpack.c.l.b16 %v147
    %v443 = vunpack.c.l.b16 %v148
    %v444 = vunpack.c.l.b16 %v149
    %v445 = vunpack.c.l.b16 %v150
    %v446 = vunpack.c.l.b16 %v151
    %v447 = vunpack.c.l.b16 %v152
    %v448 = vunpack.c.l.b16 %v153
    %v449 = vunpack.c.l.b16 %v154
    %v450 = vunpack.c.l.b16 %v155
    %v451 = vunpack.c.l.b16 %v156
    %v452 = vunpack.c.l.b16 %v157
    %v453 = vunpack.c.l.b16 %v158
    %v454 = vunpack.c.l.b16 %v159
    %v455 = vunpack.c.l.b16 %v160
    %v456 = vunpack.c.l.b16 %v161
    %v457 = vunpack.c.l.b16 %v162
    %v458 = vunpack.c.l.b16 %v163
    %v459 = vunpack.c.l.b16 %v164
    %v460 = vunpack.c.l.b16 %v165
    %v461 = vunpack.c.l.b16 %v166
    %v462 = vunpack.c.l.b16 %v167
    %v463 = vunpack.c.l.b16 %v168
    %v464 = vunpack.c.l.b16 %v169
    %v465 = vunpack.c.l.b16 %v170
    %v466 = vunpack.c.l.b16 %v171
    %v467 = vunpack.c.l.b16 %v172
    %v468 = vunpack.c.l.b16 %v173
    %v469 = vunpack.c.l.b16 %v174
    %v470 = vunpack.c.l.b16 %v175
    %v471 = vunpack.c.l.b16 %v176
    %v472 = vunpack.c.l.b16 %v177
    %v473 = vunpack.c.l.b16 %v178
    %v474 = vunpack.c.l.b16 %v179
    %v475 = vunpack.c.l.b16 %v180
    %v476 = vunpack.c.l.b16 %v181
    %v477 = vunpack.c.l.b16 %v182
    %v478 = vunpack.c.l.b16 %v183
    %v479 = vunpack.c.l.b16 %v184
    %v480 = vunpack.c.l.b16 %v185
    %v481 = vunpack.c.l.b16 %v186
    %v482 = vunpack.c.l.b16 %v187
    %v483 = vunpack.c.l.b16 %v188
    %v484 = vunpack.c.l.b16 %v189
    %v485 = vunpack.c.l.b16 %v190
    %v486 = vunpack.c.l.b16 %v191
    %v487 = vunpack.c.l.b16 %v192
    %v488 = vunpack.c.l.b16 %v193
    %v489 = vunpack.c.l.b16 %v194
    %v490 = vunpack.c.l.b16 %v195
    %v491 = vunpack.c.l.b16 %v196
    %v492 = vunpack.c.l.b16 %v197
    %v493 = vunpack.c.l.b16 %v198
    %v494 = vunpack.c.l.b16 %v199
    %v495 = vunpack.c.l.b16 %v200
    %v496 = vunpack.c.l.b16 %v201
    %v497 = vunpack.c.l.b16 %v202
    %v498 = vunpack.c.l.b16 %v203
    %v499 = vpack.c.b16 %v372, %v371
    %v500 = vpack.c.b16 %v374, %v373
    %v501 = vpack.c.b16 %v376, %v375
    %v502 = vpack.c.b16 %v378, %v377
    %v503 = vpack.c.b16 %v380, %v379
    %v504 = vpack.c.b16 %v382, %v381
    %v505 = vpack.c.b16 %v384, %v383
    %v506 = vpack.c.b16 %v386, %v385
    %v507 = vpack.c.b16 %v388, %v387
    %v508 = vpack.c.b16 %v390, %v389
    %v509 = vpack.c.b16 %v392, %v391
    %v510 = vpack.c.b16 %v394, %v393
    %v511 = vpack.c.b16 %v396, %v395
    %v512 = vpack.c.b16 %v398, %v397
    %v513 = vpack.c.b16 %v400, %v399
    %v514 = vpack.c.b16 %v402, %v401
    %v515 = vpack.c.b16 %v404, %v403
    %v516 = vpack.c.b16 %v406, %v405
    %v517 = vpack.c.b16 %v408, %v407
    %v518 = vpack.c.b16 %v410, %v409
    %v519 = vpack.c.b16 %v412, %v411
    %v520 = vpack.c.b16 %v414, %v413
    %v521 = vpack.c.b16 %v416, %v415
    %v522 = vpack.c.b16 %v418, %v417
    %v523 = vpack.c.b16 %v420, %v419
    %v524 = vpack.c.b16 %v422, %v421
    %v525 = vpack.c.b16 %v424, %v423
    %v526 = vpack.c.b16 %v426, %v425
    %v527 = vpack.c.b16 %v428, %v427
    %v528 = vpack.c.b16 %v430, %v429
    %v529 = vpack.c.b16 %v432, %v431
    %v530 = vpack.c.b16 %v434, %v433
    %v531 = vpack.c.b16 %v436, %v435
    %v532 = vpack.c.b16 %v438, %v437
    %v533 = vpack.c.b16 %v440, %v439
    %v534 = vpack.c.b16 %v442, %v441
    %v535 = vpack.c.b16 %v444, %v443
    %v536 = vpack.c.b16 %v446, %v445
    %v537 = vpack.c.b16 %v448, %v447
    %v538 = vpack.c.b16 %v450, %v449
    %v539 = vpack.c.b16 %v452, %v451
    %v540 = vpack.c.b16 %v454, %v453
    %v541 = vpack.c.b16 %v456, %v455
    %v542 = vpack.c.b16 %v458, %v457
    %v543 = vpack.c.b16 %v460, %v459
    %v544 = vpack.c.b16 %v462, %v461
    %v545 = vpack.c.b16 %v464, %v463
    %v546 = vpack.c.b16 %v466, %v465
    %v547 = vpack.c.b16 %v468, %v467
    %v548 = vpack.c.b16 %v470, %v469
    %v549 = vpack.c.b16 %v472, %v471
    %v550 = vpack.c.b16 %v474, %v473
    %v551 = vpack.c.b16 %v476, %v475
    %v552 = vpack.c.b16 %v478, %v477
    %v553 = vpack.c.b16 %v480, %v479
    %v554 = vpack.c.b16 %v482, %v481
    %v555 = vpack.c.b16 %v484, %v483
    %v556 = vpack.c.b16 %v486, %v485
    %v557 = vpack.c.b16 %v488, %v487
    %v558 = vpack.c.b16 %v490, %v489
    %v559 = vpack.c.b16 %v492, %v491
    %v560 = vpack.c.b16 %v494, %v493
    %v561 = vpack.c.b16 %v496, %v495
    %v562 = vpack.c.b16 %v498, %v497
    %627 = vmatprep.subr.bf16.mxu0 0
    %628 = vmatpush1.bf16.msra.mxu0 %v499
    %629 = vmatprep.subr.bf16.mxu0 0
    %630 = vmatpush1.bf16.msra.mxu0 %v500
    %631 = vmatprep.subr.bf16.mxu0 0
    %632 = vmatpush1.bf16.msra.mxu0 %v501
    %633 = vmatprep.subr.bf16.mxu0 0
    %634 = vmatpush1.bf16.msra.mxu0 %v502
    %635 = vmatprep.subr.bf16.mxu0 0
    %636 = vmatpush1.bf16.msra.mxu0 %v503
    %637 = vmatprep.subr.bf16.mxu0 0
    %638 = vmatpush1.bf16.msra.mxu0 %v504
    %639 = vmatprep.subr.bf16.mxu0 0
    %640 = vmatpush1.bf16.msra.mxu0 %v505
    %641 = vmatprep.subr.bf16.mxu0 0
    %642 = vmatpush1.bf16.msra.mxu0 %v506
    %643 = vmatprep.subr.bf16.mxu0 0
    %644 = vmatpush1.bf16.msra.mxu0 %v507
    %645 = vmatprep.subr.bf16.mxu0 0
    %646 = vmatpush1.bf16.msra.mxu0 %v508
    %647 = vmatprep.subr.bf16.mxu0 0
    %648 = vmatpush1.bf16.msra.mxu0 %v509
    %649 = vmatprep.subr.bf16.mxu0 0
    %650 = vmatpush1.bf16.msra.mxu0 %v510
    %651 = vmatprep.subr.bf16.mxu0 0
    %652 = vmatpush1.bf16.msra.mxu0 %v511
    %653 = vmatprep.subr.bf16.mxu0 0
    %654 = vmatpush1.bf16.msra.mxu0 %v512
    %655 = vmatprep.subr.bf16.mxu0 0
    %656 = vmatpush1.bf16.msra.mxu0 %v513
    %657 = vmatprep.subr.bf16.mxu0 0
    %658 = vmatpush1.bf16.msra.mxu0 %v514
    %659 = vmatprep.mubr.bf16.mxu0 %v228
    %660 = vmatmul.mubr.bf16.gmra.mrb[0].mxu0 %v227
    %v661 = vpop.f32.mrb[0].mxu0
    %v662 = vadd.f32 %v213, %v661
    %v663 = vpop.f32.mrb[0].mxu0
    %v664 = vpop.f32.mrb[0].mxu0
    %v665 = vpop.f32.mrb[0].mxu0
    %666 = vdwg.mxu0
    %667 = vmatprep.subr.bf16.mxu0 0
    %668 = vmatpush1.bf16.msra.mxu0 %v515
    %669 = vmatprep.subr.bf16.mxu0 0
    %670 = vmatpush1.bf16.msra.mxu0 %v516
    %671 = vmatprep.subr.bf16.mxu0 0
    %672 = vmatpush1.bf16.msra.mxu0 %v517
    %673 = vmatprep.subr.bf16.mxu0 0
    %674 = vmatpush1.bf16.msra.mxu0 %v518
    %675 = vmatprep.subr.bf16.mxu0 0
    %676 = vmatpush1.bf16.msra.mxu0 %v519
    %677 = vmatprep.subr.bf16.mxu0 0
    %678 = vmatpush1.bf16.msra.mxu0 %v520
    %679 = vmatprep.subr.bf16.mxu0 0
    %680 = vmatpush1.bf16.msra.mxu0 %v521
    %681 = vmatprep.subr.bf16.mxu0 0
    %682 = vmatpush1.bf16.msra.mxu0 %v522
    %683 = vmatprep.subr.bf16.mxu0 0
    %684 = vmatpush1.bf16.msra.mxu0 %v523
    %685 = vmatprep.subr.bf16.mxu0 0
    %686 = vmatpush1.bf16.msra.mxu0 %v524
    %687 = vmatprep.subr.bf16.mxu0 0
    %688 = vmatpush1.bf16.msra.mxu0 %v525
    %689 = vmatprep.subr.bf16.mxu0 0
    %690 = vmatpush1.bf16.msra.mxu0 %v526
    %691 = vmatprep.subr.bf16.mxu0 0
    %692 = vmatpush1.bf16.msra.mxu0 %v527
    %693 = vmatprep.subr.bf16.mxu0 0
    %694 = vmatpush1.bf16.msra.mxu0 %v528
    %695 = vmatprep.subr.bf16.mxu0 0
    %696 = vmatpush1.bf16.msra.mxu0 %v529
    %697 = vmatprep.subr.bf16.mxu0 0
    %698 = vmatpush1.bf16.msra.mxu0 %v530
    %699 = vmatprep.mubr.bf16.mxu0 %v230
    %700 = vmatmul.mubr.bf16.gmra.mrb[0].mxu0 %v229
    %v701 = vpop.f32.mrb[0].mxu0
    %v702 = vadd.f32 %v662, %v701
    %v703 = vpop.f32.mrb[0].mxu0
    %v704 = vpop.f32.mrb[0].mxu0
    %v705 = vpop.f32.mrb[0].mxu0
    %706 = vdwg.mxu0
    %707 = vmatprep.subr.bf16.mxu0 0
    %708 = vmatpush1.bf16.msra.mxu0 %v531
    %709 = vmatprep.subr.bf16.mxu0 0
    %710 = vmatpush1.bf16.msra.mxu0 %v532
    %711 = vmatprep.subr.bf16.mxu0 0
    %712 = vmatpush1.bf16.msra.mxu0 %v533
    %713 = vmatprep.subr.bf16.mxu0 0
    %714 = vmatpush1.bf16.msra.mxu0 %v534
    %715 = vmatprep.subr.bf16.mxu0 0
    %716 = vmatpush1.bf16.msra.mxu0 %v535
    %717 = vmatprep.subr.bf16.mxu0 0
    %718 = vmatpush1.bf16.msra.mxu0 %v536
    %719 = vmatprep.subr.bf16.mxu0 0
    %720 = vmatpush1.bf16.msra.mxu0 %v537
    %721 = vmatprep.subr.bf16.mxu0 0
    %722 = vmatpush1.bf16.msra.mxu0 %v538
    %723 = vmatprep.subr.bf16.mxu0 0
    %724 = vmatpush1.bf16.msra.mxu0 %v539
    %725 = vmatprep.subr.bf16.mxu0 0
    %726 = vmatpush1.bf16.msra.mxu0 %v540
    %727 = vmatprep.subr.bf16.mxu0 0
    %728 = vmatpush1.bf16.msra.mxu0 %v541
    %729 = vmatprep.subr.bf16.mxu0 0
    %730 = vmatpush1.bf16.msra.mxu0 %v542
    %731 = vmatprep.subr.bf16.mxu0 0
    %732 = vmatpush1.bf16.msra.mxu0 %v543
    %733 = vmatprep.subr.bf16.mxu0 0
    %734 = vmatpush1.bf16.msra.mxu0 %v544
    %735 = vmatprep.subr.bf16.mxu0 0
    %736 = vmatpush1.bf16.msra.mxu0 %v545
    %737 = vmatprep.subr.bf16.mxu0 0
    %738 = vmatpush1.bf16.msra.mxu0 %v546
    %739 = vmatprep.mubr.bf16.mxu0 %v232
    %740 = vmatmul.mubr.bf16.gmra.mrb[0].mxu0 %v231
    %v741 = vpop.f32.mrb[0].mxu0
    %v742 = vadd.f32 %v702, %v741
    %v743 = vpop.f32.mrb[0].mxu0
    %v744 = vpop.f32.mrb[0].mxu0
    %v745 = vpop.f32.mrb[0].mxu0
    %746 = vdwg.mxu0
    %747 = vmatprep.subr.bf16.mxu0 0
    %748 = vmatpush1.bf16.msra.mxu0 %v547
    %749 = vmatprep.subr.bf16.mxu0 0
    %750 = vmatpush1.bf16.msra.mxu0 %v548
    %751 = vmatprep.subr.bf16.mxu0 0
    %752 = vmatpush1.bf16.msra.mxu0 %v549
    %753 = vmatprep.subr.bf16.mxu0 0
    %754 = vmatpush1.bf16.msra.mxu0 %v550
    %755 = vmatprep.subr.bf16.mxu0 0
    %756 = vmatpush1.bf16.msra.mxu0 %v551
    %757 = vmatprep.subr.bf16.mxu0 0
    %758 = vmatpush1.bf16.msra.mxu0 %v552
    %759 = vmatprep.subr.bf16.mxu0 0
    %760 = vmatpush1.bf16.msra.mxu0 %v553
    %761 = vmatprep.subr.bf16.mxu0 0
    %762 = vmatpush1.bf16.msra.mxu0 %v554
    %763 = vmatprep.subr.bf16.mxu0 0
    %764 = vmatpush1.bf16.msra.mxu0 %v555
    %765 = vmatprep.subr.bf16.mxu0 0
    %766 = vmatpush1.bf16.msra.mxu0 %v556
    %767 = vmatprep.subr.bf16.mxu0 0
    %768 = vmatpush1.bf16.msra.mxu0 %v557
    %769 = vmatprep.subr.bf16.mxu0 0
    %770 = vmatpush1.bf16.msra.mxu0 %v558
    %771 = vmatprep.subr.bf16.mxu0 0
    %772 = vmatpush1.bf16.msra.mxu0 %v559
    %773 = vmatprep.subr.bf16.mxu0 0
    %774 = vmatpush1.bf16.msra.mxu0 %v560
    %775 = vmatprep.subr.bf16.mxu0 0
    %776 = vmatpush1.bf16.msra.mxu0 %v561
    %777 = vmatprep.subr.bf16.mxu0 0
    %778 = vmatpush1.bf16.msra.mxu0 %v562
    %779 = vmatprep.mubr.bf16.mxu0 %v234
    %780 = vmatmul.mubr.bf16.gmra.mrb[0].mxu0 %v233
    %v781 = vpop.f32.mrb[0].mxu0
    %v782 = vadd.f32 %v742, %v781
    %v783 = vpop.f32.mrb[0].mxu0
    %v784 = vpop.f32.mrb[0].mxu0
    %v785 = vpop.f32.mrb[0].mxu0
    %786 = vdwg.mxu0
    %v787 = vld [vmem:[#allocation5] sm:$0xff]
    %v788 = vld [vmem:[#allocation5 + $0x8] sm:$0xff]
    %v789 = vld [vmem:[#allocation5 + $0x10] sm:$0xff]
    %v790 = vld [vmem:[#allocation5 + $0x18] sm:$0xff]
    %v795 = vunpack.c.l.b16 %v787
    %v796 = vunpack.c.h.b16 %v787
    %v797 = vunpack.c.l.b16 %v788
    %v798 = vunpack.c.h.b16 %v788
    %v799 = vunpack.c.l.b16 %v789
    %v800 = vunpack.c.h.b16 %v789
    %v801 = vunpack.c.l.b16 %v790
    %v802 = vunpack.c.h.b16 %v790
    %v803 = vpack.c.b16 %v795, %v795
    %v804 = vpack.c.b16 %v796, %v796
    %v805 = vpack.c.b16 %v797, %v797
    %v806 = vpack.c.b16 %v798, %v798
    %v807 = vpack.c.b16 %v799, %v799
    %v808 = vpack.c.b16 %v800, %v800
    %v809 = vpack.c.b16 %v801, %v801
    %v810 = vpack.c.b16 %v802, %v802
    %819 = vmatprep.subr.bf16.mxu0 0
    %820 = vmatpush1.bf16.msra.mxu0 %v499
    %821 = vmatprep.subr.bf16.mxu0 0
    %822 = vmatpush1.bf16.msra.mxu0 %v500
    %823 = vmatprep.subr.bf16.mxu0 0
    %824 = vmatpush1.bf16.msra.mxu0 %v501
    %825 = vmatprep.subr.bf16.mxu0 0
    %826 = vmatpush1.bf16.msra.mxu0 %v502
    %827 = vmatprep.subr.bf16.mxu0 0
    %828 = vmatpush1.bf16.msra.mxu0 %v503
    %829 = vmatprep.subr.bf16.mxu0 0
    %830 = vmatpush1.bf16.msra.mxu0 %v504
    %831 = vmatprep.subr.bf16.mxu0 0
    %832 = vmatpush1.bf16.msra.mxu0 %v505
    %833 = vmatprep.subr.bf16.mxu0 0
    %834 = vmatpush1.bf16.msra.mxu0 %v506
    %835 = vmatprep.subr.bf16.mxu0 0
    %836 = vmatpush1.bf16.msra.mxu0 %v507
    %837 = vmatprep.subr.bf16.mxu0 0
    %838 = vmatpush1.bf16.msra.mxu0 %v508
    %839 = vmatprep.subr.bf16.mxu0 0
    %840 = vmatpush1.bf16.msra.mxu0 %v509
    %841 = vmatprep.subr.bf16.mxu0 0
    %842 = vmatpush1.bf16.msra.mxu0 %v510
    %843 = vmatprep.subr.bf16.mxu0 0
    %844 = vmatpush1.bf16.msra.mxu0 %v511
    %845 = vmatprep.subr.bf16.mxu0 0
    %846 = vmatpush1.bf16.msra.mxu0 %v512
    %847 = vmatprep.subr.bf16.mxu0 0
    %848 = vmatpush1.bf16.msra.mxu0 %v513
    %849 = vmatprep.subr.bf16.mxu0 0
    %850 = vmatpush1.bf16.msra.mxu0 %v514
    %851 = vmatprep.mubr.bf16.mxu0 %v804
    %852 = vmatmul.mubr.bf16.gmra.mrb[0].mxu0 %v803
    %v853 = vpop.f32.mrb[0].mxu0
    %v854 = vadd.f32 %v213, %v853
    %v855 = vpop.f32.mrb[0].mxu0
    %v856 = vpop.f32.mrb[0].mxu0
    %v857 = vpop.f32.mrb[0].mxu0
    %858 = vdwg.mxu0
    %859 = vmatprep.subr.bf16.mxu0 0
    %860 = vmatpush1.bf16.msra.mxu0 %v515
    %861 = vmatprep.subr.bf16.mxu0 0
    %862 = vmatpush1.bf16.msra.mxu0 %v516
    %863 = vmatprep.subr.bf16.mxu0 0
    %864 = vmatpush1.bf16.msra.mxu0 %v517
    %865 = vmatprep.subr.bf16.mxu0 0
    %866 = vmatpush1.bf16.msra.mxu0 %v518
    %867 = vmatprep.subr.bf16.mxu0 0
    %868 = vmatpush1.bf16.msra.mxu0 %v519
    %869 = vmatprep.subr.bf16.mxu0 0
    %870 = vmatpush1.bf16.msra.mxu0 %v520
    %871 = vmatprep.subr.bf16.mxu0 0
    %872 = vmatpush1.bf16.msra.mxu0 %v521
    %873 = vmatprep.subr.bf16.mxu0 0
    %874 = vmatpush1.bf16.msra.mxu0 %v522
    %875 = vmatprep.subr.bf16.mxu0 0
    %876 = vmatpush1.bf16.msra.mxu0 %v523
    %877 = vmatprep.subr.bf16.mxu0 0
    %878 = vmatpush1.bf16.msra.mxu0 %v524
    %879 = vmatprep.subr.bf16.mxu0 0
    %880 = vmatpush1.bf16.msra.mxu0 %v525
    %881 = vmatprep.subr.bf16.mxu0 0
    %882 = vmatpush1.bf16.msra.mxu0 %v526
    %883 = vmatprep.subr.bf16.mxu0 0
    %884 = vmatpush1.bf16.msra.mxu0 %v527
    %885 = vmatprep.subr.bf16.mxu0 0
    %886 = vmatpush1.bf16.msra.mxu0 %v528
    %887 = vmatprep.subr.bf16.mxu0 0
    %888 = vmatpush1.bf16.msra.mxu0 %v529
    %889 = vmatprep.subr.bf16.mxu0 0
    %890 = vmatpush1.bf16.msra.mxu0 %v530
    %891 = vmatprep.mubr.bf16.mxu0 %v806
    %892 = vmatmul.mubr.bf16.gmra.mrb[0].mxu0 %v805
    %v893 = vpop.f32.mrb[0].mxu0
    %v894 = vadd.f32 %v854, %v893
    %v895 = vpop.f32.mrb[0].mxu0
    %v896 = vpop.f32.mrb[0].mxu0
    %v897 = vpop.f32.mrb[0].mxu0
    %898 = vdwg.mxu0
    %899 = vmatprep.subr.bf16.mxu0 0
    %900 = vmatpush1.bf16.msra.mxu0 %v531
    %901 = vmatprep.subr.bf16.mxu0 0
    %902 = vmatpush1.bf16.msra.mxu0 %v532
    %903 = vmatprep.subr.bf16.mxu0 0
    %904 = vmatpush1.bf16.msra.mxu0 %v533
    %905 = vmatprep.subr.bf16.mxu0 0
    %906 = vmatpush1.bf16.msra.mxu0 %v534
    %907 = vmatprep.subr.bf16.mxu0 0
    %908 = vmatpush1.bf16.msra.mxu0 %v535
    %909 = vmatprep.subr.bf16.mxu0 0
    %910 = vmatpush1.bf16.msra.mxu0 %v536
    %911 = vmatprep.subr.bf16.mxu0 0
    %912 = vmatpush1.bf16.msra.mxu0 %v537
    %913 = vmatprep.subr.bf16.mxu0 0
    %914 = vmatpush1.bf16.msra.mxu0 %v538
    %915 = vmatprep.subr.bf16.mxu0 0
    %916 = vmatpush1.bf16.msra.mxu0 %v539
    %917 = vmatprep.subr.bf16.mxu0 0
    %918 = vmatpush1.bf16.msra.mxu0 %v540
    %919 = vmatprep.subr.bf16.mxu0 0
    %920 = vmatpush1.bf16.msra.mxu0 %v541
    %921 = vmatprep.subr.bf16.mxu0 0
    %922 = vmatpush1.bf16.msra.mxu0 %v542
    %923 = vmatprep.subr.bf16.mxu0 0
    %924 = vmatpush1.bf16.msra.mxu0 %v543
    %925 = vmatprep.subr.bf16.mxu0 0
    %926 = vmatpush1.bf16.msra.mxu0 %v544
    %927 = vmatprep.subr.bf16.mxu0 0
    %928 = vmatpush1.bf16.msra.mxu0 %v545
    %929 = vmatprep.subr.bf16.mxu0 0
    %930 = vmatpush1.bf16.msra.mxu0 %v546
    %931 = vmatprep.mubr.bf16.mxu0 %v808
    %932 = vmatmul.mubr.bf16.gmra.mrb[0].mxu0 %v807
    %v933 = vpop.f32.mrb[0].mxu0
    %v934 = vadd.f32 %v894, %v933
    %v935 = vpop.f32.mrb[0].mxu0
    %v936 = vpop.f32.mrb[0].mxu0
    %v937 = vpop.f32.mrb[0].mxu0
    %938 = vdwg.mxu0
    %939 = vmatprep.subr.bf16.mxu0 0
    %940 = vmatpush1.bf16.msra.mxu0 %v547
    %941 = vmatprep.subr.bf16.mxu0 0
    %942 = vmatpush1.bf16.msra.mxu0 %v548
    %943 = vmatprep.subr.bf16.mxu0 0
    %944 = vmatpush1.bf16.msra.mxu0 %v549
    %945 = vmatprep.subr.bf16.mxu0 0
    %946 = vmatpush1.bf16.msra.mxu0 %v550
    %947 = vmatprep.subr.bf16.mxu0 0
    %948 = vmatpush1.bf16.msra.mxu0 %v551
    %949 = vmatprep.subr.bf16.mxu0 0
    %950 = vmatpush1.bf16.msra.mxu0 %v552
    %951 = vmatprep.subr.bf16.mxu0 0
    %952 = vmatpush1.bf16.msra.mxu0 %v553
    %953 = vmatprep.subr.bf16.mxu0 0
    %954 = vmatpush1.bf16.msra.mxu0 %v554
    %955 = vmatprep.subr.bf16.mxu0 0
    %956 = vmatpush1.bf16.msra.mxu0 %v555
    %957 = vmatprep.subr.bf16.mxu0 0
    %958 = vmatpush1.bf16.msra.mxu0 %v556
    %959 = vmatprep.subr.bf16.mxu0 0
    %960 = vmatpush1.bf16.msra.mxu0 %v557
    %961 = vmatprep.subr.bf16.mxu0 0
    %962 = vmatpush1.bf16.msra.mxu0 %v558
    %963 = vmatprep.subr.bf16.mxu0 0
    %964 = vmatpush1.bf16.msra.mxu0 %v559
    %965 = vmatprep.subr.bf16.mxu0 0
    %966 = vmatpush1.bf16.msra.mxu0 %v560
    %967 = vmatprep.subr.bf16.mxu0 0
    %968 = vmatpush1.bf16.msra.mxu0 %v561
    %969 = vmatprep.subr.bf16.mxu0 0
    %970 = vmatpush1.bf16.msra.mxu0 %v562
    %971 = vmatprep.mubr.bf16.mxu0 %v810
    %972 = vmatmul.mubr.bf16.gmra.mrb[0].mxu0 %v809
    %v973 = vpop.f32.mrb[0].mxu0
    %v974 = vadd.f32 %v934, %v973
    %v975 = vpop.f32.mrb[0].mxu0
    %v976 = vpop.f32.mrb[0].mxu0
    %v977 = vpop.f32.mrb[0].mxu0
    %978 = vdwg.mxu0
    %v979 = vld [vmem:[#allocation7] sm:$0xff]
    %v980 = vld [vmem:[#allocation7 + $0x8] sm:$0xff]
    %v981 = vld [vmem:[#allocation7 + $0x10] sm:$0xff]
    %v982 = vld [vmem:[#allocation7 + $0x18] sm:$0xff]
    %v987 = vunpack.c.l.b16 %v979
    %v988 = vunpack.c.h.b16 %v979
    %v989 = vunpack.c.l.b16 %v980
    %v990 = vunpack.c.h.b16 %v980
    %v991 = vunpack.c.l.b16 %v981
    %v992 = vunpack.c.h.b16 %v981
    %v993 = vunpack.c.l.b16 %v982
    %v994 = vunpack.c.h.b16 %v982
    %v995 = vpack.c.b16 %v987, %v987
    %v996 = vpack.c.b16 %v988, %v988
    %v997 = vpack.c.b16 %v989, %v989
    %v998 = vpack.c.b16 %v990, %v990
    %v999 = vpack.c.b16 %v991, %v991
    %v1000 = vpack.c.b16 %v992, %v992
    %v1001 = vpack.c.b16 %v993, %v993
    %v1002 = vpack.c.b16 %v994, %v994
    %1011 = vmatprep.subr.bf16.mxu0 0
    %1012 = vmatpush1.bf16.msra.mxu0 %v499
    %1013 = vmatprep.subr.bf16.mxu0 0
    %1014 = vmatpush1.bf16.msra.mxu0 %v500
    %1015 = vmatprep.subr.bf16.mxu0 0
    %1016 = vmatpush1.bf16.msra.mxu0 %v501
    %1017 = vmatprep.subr.bf16.mxu0 0
    %1018 = vmatpush1.bf16.msra.mxu0 %v502
    %1019 = vmatprep.subr.bf16.mxu0 0
    %1020 = vmatpush1.bf16.msra.mxu0 %v503
    %1021 = vmatprep.subr.bf16.mxu0 0
    %1022 = vmatpush1.bf16.msra.mxu0 %v504
    %1023 = vmatprep.subr.bf16.mxu0 0
    %1024 = vmatpush1.bf16.msra.mxu0 %v505
    %1025 = vmatprep.subr.bf16.mxu0 0
    %1026 = vmatpush1.bf16.msra.mxu0 %v506
    %1027 = vmatprep.subr.bf16.mxu0 0
    %1028 = vmatpush1.bf16.msra.mxu0 %v507
    %1029 = vmatprep.subr.bf16.mxu0 0
    %1030 = vmatpush1.bf16.msra.mxu0 %v508
    %1031 = vmatprep.subr.bf16.mxu0 0
    %1032 = vmatpush1.bf16.msra.mxu0 %v509
    %1033 = vmatprep.subr.bf16.mxu0 0
    %1034 = vmatpush1.bf16.msra.mxu0 %v510
    %1035 = vmatprep.subr.bf16.mxu0 0
    %1036 = vmatpush1.bf16.msra.mxu0 %v511
    %1037 = vmatprep.subr.bf16.mxu0 0
    %1038 = vmatpush1.bf16.msra.mxu0 %v512
    %1039 = vmatprep.subr.bf16.mxu0 0
    %1040 = vmatpush1.bf16.msra.mxu0 %v513
    %1041 = vmatprep.subr.bf16.mxu0 0
    %1042 = vmatpush1.bf16.msra.mxu0 %v514
    %1043 = vmatprep.mubr.bf16.mxu0 %v996
    %1044 = vmatmul.mubr.bf16.gmra.mrb[0].mxu0 %v995
    %v1045 = vpop.f32.mrb[0].mxu0
    %v1046 = vadd.f32 %v213, %v1045
    %v1047 = vpop.f32.mrb[0].mxu0
    %v1048 = vpop.f32.mrb[0].mxu0
    %v1049 = vpop.f32.mrb[0].mxu0
    %1050 = vdwg.mxu0
    %1051 = vmatprep.subr.bf16.mxu0 0
    %1052 = vmatpush1.bf16.msra.mxu0 %v515
    %1053 = vmatprep.subr.bf16.mxu0 0
    %1054 = vmatpush1.bf16.msra.mxu0 %v516
    %1055 = vmatprep.subr.bf16.mxu0 0
    %1056 = vmatpush1.bf16.msra.mxu0 %v517
    %1057 = vmatprep.subr.bf16.mxu0 0
    %1058 = vmatpush1.bf16.msra.mxu0 %v518
    %1059 = vmatprep.subr.bf16.mxu0 0
    %1060 = vmatpush1.bf16.msra.mxu0 %v519
    %1061 = vmatprep.subr.bf16.mxu0 0
    %1062 = vmatpush1.bf16.msra.mxu0 %v520
    %1063 = vmatprep.subr.bf16.mxu0 0
    %1064 = vmatpush1.bf16.msra.mxu0 %v521
    %1065 = vmatprep.subr.bf16.mxu0 0
    %1066 = vmatpush1.bf16.msra.mxu0 %v522
    %1067 = vmatprep.subr.bf16.mxu0 0
    %1068 = vmatpush1.bf16.msra.mxu0 %v523
    %1069 = vmatprep.subr.bf16.mxu0 0
    %1070 = vmatpush1.bf16.msra.mxu0 %v524
    %1071 = vmatprep.subr.bf16.mxu0 0
    %1072 = vmatpush1.bf16.msra.mxu0 %v525
    %1073 = vmatprep.subr.bf16.mxu0 0
    %1074 = vmatpush1.bf16.msra.mxu0 %v526
    %1075 = vmatprep.subr.bf16.mxu0 0
    %1076 = vmatpush1.bf16.msra.mxu0 %v527
    %1077 = vmatprep.subr.bf16.mxu0 0
    %1078 = vmatpush1.bf16.msra.mxu0 %v528
    %1079 = vmatprep.subr.bf16.mxu0 0
    %1080 = vmatpush1.bf16.msra.mxu0 %v529
    %1081 = vmatprep.subr.bf16.mxu0 0
    %1082 = vmatpush1.bf16.msra.mxu0 %v530
    %1083 = vmatprep.mubr.bf16.mxu0 %v998
    %1084 = vmatmul.mubr.bf16.gmra.mrb[0].mxu0 %v997
    %v1085 = vpop.f32.mrb[0].mxu0
    %v1086 = vadd.f32 %v1046, %v1085
    %v1087 = vpop.f32.mrb[0].mxu0
    %v1088 = vpop.f32.mrb[0].mxu0
    %v1089 = vpop.f32.mrb[0].mxu0
    %1090 = vdwg.mxu0
    %1091 = vmatprep.subr.bf16.mxu0 0
    %1092 = vmatpush1.bf16.msra.mxu0 %v531
    %1093 = vmatprep.subr.bf16.mxu0 0
    %1094 = vmatpush1.bf16.msra.mxu0 %v532
    %1095 = vmatprep.subr.bf16.mxu0 0
    %1096 = vmatpush1.bf16.msra.mxu0 %v533
    %1097 = vmatprep.subr.bf16.mxu0 0
    %1098 = vmatpush1.bf16.msra.mxu0 %v534
    %1099 = vmatprep.subr.bf16.mxu0 0
    %1100 = vmatpush1.bf16.msra.mxu0 %v535
    %1101 = vmatprep.subr.bf16.mxu0 0
    %1102 = vmatpush1.bf16.msra.mxu0 %v536
    %1103 = vmatprep.subr.bf16.mxu0 0
    %1104 = vmatpush1.bf16.msra.mxu0 %v537
    %1105 = vmatprep.subr.bf16.mxu0 0
    %1106 = vmatpush1.bf16.msra.mxu0 %v538
    %1107 = vmatprep.subr.bf16.mxu0 0
    %1108 = vmatpush1.bf16.msra.mxu0 %v539
    %1109 = vmatprep.subr.bf16.mxu0 0
    %1110 = vmatpush1.bf16.msra.mxu0 %v540
    %1111 = vmatprep.subr.bf16.mxu0 0
    %1112 = vmatpush1.bf16.msra.mxu0 %v541
    %1113 = vmatprep.subr.bf16.mxu0 0
    %1114 = vmatpush1.bf16.msra.mxu0 %v542
    %1115 = vmatprep.subr.bf16.mxu0 0
    %1116 = vmatpush1.bf16.msra.mxu0 %v543
    %1117 = vmatprep.subr.bf16.mxu0 0
    %1118 = vmatpush1.bf16.msra.mxu0 %v544
    %1119 = vmatprep.subr.bf16.mxu0 0
    %1120 = vmatpush1.bf16.msra.mxu0 %v545
    %1121 = vmatprep.subr.bf16.mxu0 0
    %1122 = vmatpush1.bf16.msra.mxu0 %v546
    %1123 = vmatprep.mubr.bf16.mxu0 %v1000
    %1124 = vmatmul.mubr.bf16.gmra.mrb[0].mxu0 %v999
    %v1125 = vpop.f32.mrb[0].mxu0
    %v1126 = vadd.f32 %v1086, %v1125
    %v1127 = vpop.f32.mrb[0].mxu0
    %v1128 = vpop.f32.mrb[0].mxu0
    %v1129 = vpop.f32.mrb[0].mxu0
    %1130 = vdwg.mxu0
    %1131 = vmatprep.subr.bf16.mxu0 0
    %1132 = vmatpush1.bf16.msra.mxu0 %v547
    %1133 = vmatprep.subr.bf16.mxu0 0
    %1134 = vmatpush1.bf16.msra.mxu0 %v548
    %1135 = vmatprep.subr.bf16.mxu0 0
    %1136 = vmatpush1.bf16.msra.mxu0 %v549
    %1137 = vmatprep.subr.bf16.mxu0 0
    %1138 = vmatpush1.bf16.msra.mxu0 %v550
    %1139 = vmatprep.subr.bf16.mxu0 0
    %1140 = vmatpush1.bf16.msra.mxu0 %v551
    %1141 = vmatprep.subr.bf16.mxu0 0
    %1142 = vmatpush1.bf16.msra.mxu0 %v552
    %1143 = vmatprep.subr.bf16.mxu0 0
    %1144 = vmatpush1.bf16.msra.mxu0 %v553
    %1145 = vmatprep.subr.bf16.mxu0 0
    %1146 = vmatpush1.bf16.msra.mxu0 %v554
    %1147 = vmatprep.subr.bf16.mxu0 0
    %1148 = vmatpush1.bf16.msra.mxu0 %v555
    %1149 = vmatprep.subr.bf16.mxu0 0
    %1150 = vmatpush1.bf16.msra.mxu0 %v556
    %1151 = vmatprep.subr.bf16.mxu0 0
    %1152 = vmatpush1.bf16.msra.mxu0 %v557
    %1153 = vmatprep.subr.bf16.mxu0 0
    %1154 = vmatpush1.bf16.msra.mxu0 %v558
    %1155 = vmatprep.subr.bf16.mxu0 0
    %1156 = vmatpush1.bf16.msra.mxu0 %v559
    %1157 = vmatprep.subr.bf16.mxu0 0
    %1158 = vmatpush1.bf16.msra.mxu0 %v560
    %1159 = vmatprep.subr.bf16.mxu0 0
    %1160 = vmatpush1.bf16.msra.mxu0 %v561
    %1161 = vmatprep.subr.bf16.mxu0 0
    %1162 = vmatpush1.bf16.msra.mxu0 %v562
    %1163 = vmatprep.mubr.bf16.mxu0 %v1002
    %1164 = vmatmul.mubr.bf16.gmra.mrb[0].mxu0 %v1001
    %v1165 = vpop.f32.mrb[0].mxu0
    %v1166 = vadd.f32 %v1126, %v1165
    %v1167 = vpop.f32.mrb[0].mxu0
    %v1168 = vpop.f32.mrb[0].mxu0
    %v1169 = vpop.f32.mrb[0].mxu0
    %1170 = vdwg.mxu0
    %1171 = vst [vmem:[#allocation10] sm:$0xff] %v782
    %1172 = vst [vmem:[#allocation11] sm:$0xff] %v974
    %1173 = vst [vmem:[#allocation13] sm:$0xff] %v1166
    %v1174 = vlaneseq
    %v1175 = vand.u32 %v1174, 127
    %vm1176 = vcmp.lt.s32.totalorder %v1175, 32
    %v1177 = vsel %vm1176, 1e-06, 0.0
    %v1178 = vsub.f32 %v782, %v974
    %v1179 = vadd.f32 %v1178, %v1177
    %v1180 = vsub.f32 %v782, %v1166
    %v1181 = vadd.f32 %v1180, %v1177
    %v1182 = vmul.f32 %v1179, %v1179
    %1183 = vadd.xlane.f32.xlu0 %v1182
    %v1184 = vpop.xlane.xlu0 %1183
    %v1185 = vrsqrt.pop %v1184
    %v1186 = vmul.f32 %v1184, %v1185
    %vm1187 = vcmp.eq.f32.partialorder %v1184, inf
    %v1188 = vsel %vm1187, %v1184, %v1186
    %vm1189 = vcmp.eq.f32.partialorder %v1184, 0.0
    %v1190 = vand.u32 %v1184, 2147483648
    %v1191 = vsel %vm1189, %v1190, %v1188
    %vm1192 = vcmask 7168
    %1193 = vst.msk [vmem:[%s5] sm:$0xff] %vm1192, %v1191
    %v1194 = vmul.f32 %v1181, %v1181
    %1195 = vadd.xlane.f32.xlu0 %v1194
    %v1196 = vpop.xlane.xlu0 %1195
    %v1197 = vrsqrt.pop %v1196
    %v1198 = vmul.f32 %v1196, %v1197
    %vm1199 = vcmp.eq.f32.partialorder %v1196, inf
    %v1200 = vsel %vm1199, %v1196, %v1198
    %vm1201 = vcmp.eq.f32.partialorder %v1196, 0.0
    %v1202 = vand.u32 %v1196, 2147483648
    %v1203 = vsel %vm1201, %v1202, %v1200
    %vm1204 = vcmask 15368
    %1205 = vst.msk [vmem:[%s5] sm:$0xff] %vm1204, %v1203
    // Predicated region
    $region38: #{tpu_custom_call.1} parent=1 // pred_check
      _
    $region39: #{tpu_custom_call.1} parent=1 // pred_check_branch
      %1207 = sbr.rel (0) target = $region41
    $region40: #{tpu_custom_call.1} parent=1 // pred_region
      _
    $region41: #{tpu_custom_call.1} parent=1 // pred_fallthru
      _
    // Predicated region
    $region42: #{tpu_custom_call.1} parent=1 // pred_check
      _
    $region43: #{tpu_custom_call.1} parent=1 // pred_check_branch
      %1209 = sbr.rel (0) target = $region45
    $region44: #{tpu_custom_call.1} parent=1 // pred_region
      %s1211 = ssub.s32 128, 128
      %1212 = vsyncadd [#allocation4], %s1211
      %s1214 = sshll.u32 [#allocation10], 4
      %s1215 = int_to_ptr.vmem [resolvable:$true] %s1214
      %1217 = dma.vmem_to_hbm [thread:$0]  %s1215, 128, %s6, [#allocation4]
    $region45: #{tpu_custom_call.1} parent=1 // pred_fallthru
      _
    // Predicated region
    $region46: #{tpu_custom_call.1} parent=1 // pred_check
      _
    $region47: #{tpu_custom_call.1} parent=1 // pred_check_branch
      %1219 = sbr.rel (0) target = $region49
    $region48: #{tpu_custom_call.1} parent=1 // pred_region
      %s1221 = ssub.s32 128, 128
      %1222 = vsyncadd [#allocation12], %s1221
      %s1224 = sshll.u32 [#allocation11], 4
      %s1225 = int_to_ptr.vmem [resolvable:$true] %s1224
      %1227 = dma.vmem_to_hbm [thread:$0]  %s1225, 128, %s7, [#allocation12]
    $region49: #{tpu_custom_call.1} parent=1 // pred_fallthru
      _
    // Predicated region
    $region50: #{tpu_custom_call.1} parent=1 // pred_check
      _
    $region51: #{tpu_custom_call.1} parent=1 // pred_check_branch
      %1229 = sbr.rel (0) target = $region53
    $region52: #{tpu_custom_call.1} parent=1 // pred_region
      %s1231 = ssub.s32 128, 128
      %1232 = vsyncadd [#allocation12], %s1231
      %s1234 = sshll.u32 [#allocation13], 4
      %s1235 = int_to_ptr.vmem [resolvable:$true] %s1234
      %1237 = dma.vmem_to_hbm [thread:$0]  %s1235, 128, %s8, [#allocation12]
    $region53: #{tpu_custom_call.1} parent=1 // pred_fallthru
      _
    // Predicated region
    $region54: #{tpu_custom_call.1} parent=1 // pred_check
      _
    $region55: #{tpu_custom_call.1} parent=1 // pred_check_branch
      %1239 = sbr.rel (0) target = $region57
    $region56: #{tpu_custom_call.1} parent=1 // pred_region
      _
    $region57: #{tpu_custom_call.1} parent=1 // pred_fallthru
      _
    // Predicated region
    $region58: #{tpu_custom_call.1} parent=1 // pred_check
      _
    $region59: #{tpu_custom_call.1} parent=1 // pred_check_branch
      %1241 = sbr.rel (0) target = $region61
    $region60: #{tpu_custom_call.1} parent=1 // pred_region
      %1242 = dma.done [#allocation4], 128
    $region61: #{tpu_custom_call.1} parent=1 // pred_fallthru
      _
    // Predicated region
    $region62: #{tpu_custom_call.1} parent=1 // pred_check
      _
    $region63: #{tpu_custom_call.1} parent=1 // pred_check_branch
      %1244 = sbr.rel (0) target = $region65
    $region64: #{tpu_custom_call.1} parent=1 // pred_region
      %1245 = dma.done [#allocation12], 128
    $region65: #{tpu_custom_call.1} parent=1 // pred_fallthru
      _
    // Predicated region
    $region66: #{tpu_custom_call.1} parent=1 // pred_check
      _
    $region67: #{tpu_custom_call.1} parent=1 // pred_check_branch
      %1247 = sbr.rel (0) target = $region69
    $region68: #{tpu_custom_call.1} parent=1 // pred_region
      %1248 = dma.done [#allocation12], 128
    $region69: #{tpu_custom_call.1} parent=1 // pred_fallthru
      _
    %1249 = vsyncpa [#allocation3], 1
    %1250 = vsyncpa [#allocation6], 1
    %1251 = vsyncpa [#allocation9], 1
    %1252 = vsyncpa [#allocation4], 1
    %1253 = vsyncpa [#allocation12], 1

</llo_original>
